<compile_context>
chip_gen: v7x
topology: tpu7x:2x2x1
jax: 0.10.0
libtpu: 0.0.40
codegen_flags: <defaults>
</compile_context>

<pallas_src>
import jax
import jax.numpy as jnp
from jax.experimental import pallas as pl
from jax.experimental.pallas import tpu as pltpu


def flatten_reference(x: jax.Array) -> jax.Array:
    """Recommended production path: torch.flatten(x, 1) is a zero-cost reshape."""
    return jnp.reshape(x, (x.shape[0], -1))


def _copy_kernel(x_ref, o_ref):
    # Lane-dense identity copy of one (N, TILE_C) tile. This is the fusion
    # site where downstream elementwise work could live.
    o_ref[...] = x_ref[...]


def flatten_from_1(x: jax.Array, *, tile_c: int = 1024) -> jax.Array:
    """torch.flatten(x, 1) for a 4D (N, C, 1, 1) input, via a Pallas copy kernel.

    The squeeze/flatten is done as a free reshape in the wrapper; the Pallas
    kernel only moves a lane-dense 2D slab, tiled over C in 128-multiple
    blocks on a "parallel" grid axis.
    """
    N, C, H, W = x.shape
    assert H == 1 and W == 1, "module-specific shape: trailing spatial dims are 1x1"

    # Zero-cost layout change: (N, C, 1, 1) -> (N, C). This is the actual
    # flatten; everything below is an (optional) identity copy.
    x2d = jnp.reshape(x, (N, C))

    # Tile sizing: full-array block if small, otherwise a multiple of 128
    # lanes so every store is an unmasked vst (except possibly the last,
    # masked, remainder block). ~1024 f32 lanes x N rows stays tiny vs. VMEM
    # on all generations (v7x's 64 MiB included).
    if C <= tile_c:
        tile_c = C                      # full-extent block: always layout-legal
    else:
        tile_c = max(128, (tile_c // 128) * 128)

    grid = (pl.cdiv(C, tile_c),)

    return pl.pallas_call(
        _copy_kernel,
        out_shape=jax.ShapeDtypeStruct((N, C), x.dtype),
        grid=grid,
        in_specs=[pl.BlockSpec((N, tile_c), lambda j: (0, j))],
        out_specs=pl.BlockSpec((N, tile_c), lambda j: (0, j)),
        compiler_params=pltpu.CompilerParams(
            dimension_semantics=("parallel",),
        ),
    )(x2d)


if __name__ == "__main__":
    # Deterministic input matching the module's shape: (1, 2208, 1, 1)
    key = jax.random.PRNGKey(0)
    x569 = jax.random.normal(key, (1, 2208, 1, 1), dtype=jnp.float32)

    # Pallas path (fusion-site kernel).
    x570 = flatten_from_1(x569)
    jax.block_until_ready(x570)

    # Correctness check vs. the zero-cost reshape (torch.flatten(x, 1) semantics).
    ref = flatten_reference(x569)
    assert x570.shape == (1, 2208), x570.shape
    assert x570.dtype == x569.dtype
    assert bool(jnp.array_equal(x570, ref))

    print("KERNEL_OK")
</pallas_src>

<mosaic_0001>
module attributes {stable_mosaic.version = 11 : i64} {
  func.func @_copy_kernel(%arg0: i32, %arg1: memref<1x1024xf32, #tpu.memory_space<vmem>>, %arg2: memref<1x1024xf32, #tpu.memory_space<vmem>>) attributes {dimension_semantics = [#tpu.dimension_semantics<parallel>], iteration_bounds = array<i64: 3>, scalar_prefetch = 0 : i64, scratch_operands = 0 : i64, tpu.core_type = #tpu.core_type<tc>, window_params = [{transform_indices = @transform_0, window_bounds = array<i64: 1, 1024>}, {transform_indices = @transform_1, window_bounds = array<i64: 1, 1024>}]} {
    %c0 = arith.constant 0 : index
    %c0_0 = arith.constant 0 : index
    %0 = vector.load %arg1[%c0, %c0_0] : memref<1x1024xf32, #tpu.memory_space<vmem>>, vector<1x1024xf32>
    %c0_1 = arith.constant 0 : index
    %c0_2 = arith.constant 0 : index
    %1 = vector.load %arg2[%c0_1, %c0_2] : memref<1x1024xf32, #tpu.memory_space<vmem>>, vector<1x1024xf32>
    tpu.vector_store %arg2[%c0_1, %c0_2], %0 {strides = array<i32>} : memref<1x1024xf32, #tpu.memory_space<vmem>>, vector<1x1024xf32>,
    return
  }
  func.func @transform_0(%arg0: i32) -> (i32, i32) {
    %c0_i32 = arith.constant 0 : i32
    %c0_i32_0 = arith.constant 0 : i32
    return %c0_i32, %arg0 : i32, i32
  }
  func.func @transform_1(%arg0: i32) -> (i32, i32) {
    %c0_i32 = arith.constant 0 : i32
    %c0_i32_0 = arith.constant 0 : i32
    return %c0_i32, %arg0 : i32, i32
  }
}

</mosaic_0001>

<llo_original>
// kernel: tpu_custom_call.1
$region0: #{tpu_custom_call.1}
  #allocation0 [shape = 'u32[]', space=smem, size = 0x4, offset = 0x4, fixed_abs, tag = 'smem constant byte address 0x4 - core index']
  #allocation1 [shape = 'u32[144,128]{1,0:T(1,128)}', space=vmem, size = 0x12000, scoped, tag = 'internal scratch']
  %s0 = inlined_call_operand.hbm [shape: f32[1,2208], index: 0, kind: input, shape index: {}]
  %s1 = inlined_call_operand.hbm [shape: f32[1,2208], index: 1, kind: output, shape index: {}]
  %s2 = sld [smem:[#allocation0]]
  $region41: #{tpu_custom_call.1} parent=0
    _
  %s4 = ssub.s32 1, %s2
  %s5 = scalar_select 0, %s4, %s2
  $region1: #{tpu_custom_call.1} parent=0
    #allocation2 [shape = 'u8[8192]{0}', space=vmem, size = 0x2000, scoped, tag = 'input window, operand 0']
    #allocation3 [shape = 's32[2]{0}', space=sflag, size = 0x8, scoped, tag = 'scoped memory for tpu_custom_call.1']
    #allocation4 [shape = 's32[2]{0}', space=sflag, size = 0x8, scoped, tag = 'scoped memory for tpu_custom_call.1']
    #allocation5 [shape = 'u8[8192]{0}', space=vmem, size = 0x2000, scoped, tag = 'output window, operand 0']
    %6 = vsyncpa [#allocation3], 0
    %s7 = scalar_lea.sflag [#allocation3], 1
    %8 = vsyncpa %s7, 0
    %9 = vsyncpa [#allocation4], 0
    %s10 = scalar_lea.sflag [#allocation4], 1
    %11 = vsyncpa %s10, 0
    loop: start=0, step=1, limit=5
    $region2: #{tpu_custom_call.1} parent=1 // loop_pre_header
      _
    $region3: #{tpu_custom_call.1} parent=1 // loop_header
      %s13 = sphi 0, %s17
      %p14 = scmp.ge.s32.totalorder %s13, 5
      %s23 = sphi 0, %s25
      %s26 = sphi 0, %s23
      %s27 = sphi 0, %s26
      %s43 = sphi 0, %s27
      %s49 = sphi 0, %s51
      %s52 = sphi 0, %s49
      %s53 = sphi 0, %s52
      %s69 = sphi 0, %s53
    $region4: #{tpu_custom_call.1} parent=1 // loop_header_branch
      %16 = sbr.rel (%p14) target = $region8
    $region5: #{tpu_custom_call.1} parent=1 // loop_body
      %s18 = ssub.s32 %s13, 1
      %s19 = ssub.s32 %s13, 2
      %s20 = sadd.s32 %s13, 1
      %s21 = ssub.s32 %s13, %s20
      %p22 = scmp.eq.s32.totalorder %s21, 0
      %s24 = sadd.s32 %s23, 1
      %s25 = scalar_select %p22, %s23, %s24
      %p28 = pneg %p22
      %p29 = scmp.eq.s32.totalorder %s13, 2
      %p30 = por %p28, %p29
      %p31 = scmp.ne.s32.totalorder %s23, %s26
      %p32 = scmp.eq.s32.totalorder %s13, 0
      %p33 = por %p31, %p32
      %p34 = scmp.ne.s32.totalorder %s23, %s26
      %p35 = scmp.eq.s32.totalorder %s18, 2
      %p36 = por %p34, %p35
      %p37 = scmp.ne.s32.totalorder %s26, %s27
      %p38 = scmp.eq.s32.totalorder %s18, 0
      %p39 = por %p37, %p38
      %p40 = scmp.ne.s32.totalorder %s26, %s27
      %p41 = scmp.eq.s32.totalorder %s19, 2
      %p42 = por %p40, %p41
      %p44 = scmp.ne.s32.totalorder %s27, %s43
      %p45 = scmp.eq.s32.totalorder %s19, 0
      %p46 = por %p44, %p45
      %s47 = ssub.s32 %s13, %s20
      %p48 = scmp.eq.s32.totalorder %s47, 0
      %s50 = sadd.s32 %s49, 1
      %s51 = scalar_select %p48, %s49, %s50
      %p54 = pneg %p48
      %p55 = scmp.eq.s32.totalorder %s13, 2
      %p56 = por %p54, %p55
      %p57 = scmp.ne.s32.totalorder %s49, %s52
      %p58 = scmp.eq.s32.totalorder %s13, 0
      %p59 = por %p57, %p58
      %p60 = scmp.ne.s32.totalorder %s49, %s52
      %p61 = scmp.eq.s32.totalorder %s18, 2
      %p62 = por %p60, %p61
      %p63 = scmp.ne.s32.totalorder %s52, %s53
      %p64 = scmp.eq.s32.totalorder %s18, 0
      %p65 = por %p63, %p64
      %p66 = scmp.ne.s32.totalorder %s52, %s53
      %p67 = scmp.eq.s32.totalorder %s19, 2
      %p68 = por %p66, %p67
      %p70 = scmp.ne.s32.totalorder %s53, %s69
      %p71 = scmp.eq.s32.totalorder %s19, 0
      %p72 = por %p70, %p71
      %p73 = scmp.le.s32.totalorder 1, %s13
      %p74 = scmp.lt.s32.totalorder %s13, 4
      %p75 = pnand %p73, %p74
      %p76 = pneg %p75
      // Predicated region
      $region9: #{tpu_custom_call.1} parent=5 // pred_check
        _
      $region10: #{tpu_custom_call.1} parent=5 // pred_check_branch
        %78 = sbr.rel (%p75) target = $region12
      $region11: #{tpu_custom_call.1} parent=5 // pred_region
        %s79 = ssub.s32 %s13, 1
      $region12: #{tpu_custom_call.1} parent=5 // pred_fallthru
        _
      %p80 = scmp.lt.s32.totalorder %s13, 3
      // Predicated region
      $region13: #{tpu_custom_call.1} parent=5 // pred_check
        %p81 = pneg %p80
      $region14: #{tpu_custom_call.1} parent=5 // pred_check_branch
        %83 = sbr.rel (%p81) target = $region16
      $region15: #{tpu_custom_call.1} parent=5 // pred_region
        // Predicated region
        $region17: #{tpu_custom_call.1} parent=15 // pred_check
          %p84 = pneg %p33
        $region18: #{tpu_custom_call.1} parent=15 // pred_check_branch
          %86 = sbr.rel (%p84) target = $region20
        $region19: #{tpu_custom_call.1} parent=15 // pred_region
          %s87 = sand.u32 %s23, 1
          %s88 = scalar_lea.sflag [#allocation3], %s87
          %s89 = sand.u32 %s23, 1
          %s90 = smul.addr %s89, 8
          %s91 = scalar_lea.vmem [#allocation2], %s90
          %s92 = smul.u32 8, %s13
          %s93 = ssub.s32 18, %s92
          %p94 = scmp.lt.s32.totalorder %s93, 8
          %s95 = scalar_select %p94, %s93, 8
          %s96 = smul.u32 16, %s95
          %s98 = ssub.s32 128, %s96
          %99 = vsyncadd %s88, %s98
          %p100 = scmp.ne.s32.totalorder 0, %s96
          %s101 = smul.addr %s92, 16
          %s102 = scalar_lea.hbm %s0, %s101
          %s103 = sshll.u32 %s95, 4
          %s104 = sshll.u32 %s91, 4
          %s105 = int_to_ptr.vmem [resolvable:$true] %s104
          %107 = dma.hbm_to_vmem [thread:$0]  (%p100), %s102, %s103, %s105, %s88
        $region20: #{tpu_custom_call.1} parent=15 // pred_fallthru
          _
      $region16: #{tpu_custom_call.1} parent=5 // pred_fallthru
        _
      %p108 = scmp.le.s32.totalorder 1, %s13
      %p109 = scmp.lt.s32.totalorder %s13, 4
      %p110 = pnand %p108, %p109
      %p111 = pneg %p110
      // Predicated region
      $region21: #{tpu_custom_call.1} parent=5 // pred_check
        _
      $region22: #{tpu_custom_call.1} parent=5 // pred_check_branch
        %113 = sbr.rel (%p110) target = $region24
      $region23: #{tpu_custom_call.1} parent=5 // pred_region
        %s114 = ssub.s32 %s13, 1
        %s115 = sand.u32 %s26, 1
        %s116 = scalar_lea.sflag [#allocation3], %s115
        %s117 = sand.u32 %s26, 1
        %s118 = smul.addr %s117, 8
        %s119 = scalar_lea.vmem [#allocation2], %s118
        // Predicated region
        $region25: #{tpu_custom_call.1} parent=23 // pred_check
          %p120 = pneg %p39
        $region26: #{tpu_custom_call.1} parent=23 // pred_check_branch
          %122 = sbr.rel (%p120) target = $region28
        $region27: #{tpu_custom_call.1} parent=23 // pred_region
          %123 = dma.done %s116, 128
        $region28: #{tpu_custom_call.1} parent=23 // pred_fallthru
          _
        %s124 = sand.u32 %s26, 1
        %s125 = scalar_lea.sflag [#allocation3], %s124
        %s126 = sand.u32 %s26, 1
        %s127 = smul.addr %s126, 8
        %s128 = scalar_lea.vmem [#allocation2], %s127
        %p129 = pneg %p39
        %p130 = pneg %p36
        %p131 = pneg %p65
        %p132 = pneg %p62
        %s133 = sand.u32 %s52, 1
        %s134 = scalar_lea.sflag [#allocation4], %s133
        %s135 = sand.u32 %s52, 1
        %s136 = smul.addr %s135, 8
        %s137 = scalar_lea.vmem [#allocation5], %s136
        %s138 = smul.u32 8, %s18
        %s139 = ssub.s32 18, %s138
        %p140 = scmp.lt.s32.totalorder %s139, 8
        %s141 = scalar_select %p140, %s139, 8
        %s142 = smul.u32 16, %s141
        %s143 = smul.u32 8, %s18
        %s144 = ssub.s32 18, %s143
        %p145 = scmp.lt.s32.totalorder %s144, 8
        %s146 = scalar_select %p145, %s144, 8
        %s147 = smul.u32 16, %s146
        %v148 = vld [vmem:[%s119] sm:$0xff]
        %149 = vst [vmem:[%s137] sm:$0xff] %v148
        %s150 = sand.u32 %s52, 1
        %s151 = scalar_lea.sflag [#allocation4], %s150
        %s152 = sand.u32 %s52, 1
        %s153 = smul.addr %s152, 8
        %s154 = scalar_lea.vmem [#allocation5], %s153
        // Predicated region
        $region29: #{tpu_custom_call.1} parent=23 // pred_check
          %p155 = pneg %p62
        $region30: #{tpu_custom_call.1} parent=23 // pred_check_branch
          %157 = sbr.rel (%p155) target = $region32
        $region31: #{tpu_custom_call.1} parent=23 // pred_region
          %s158 = smul.u32 8, %s18
          %s159 = ssub.s32 18, %s158
          %p160 = scmp.lt.s32.totalorder %s159, 8
          %s161 = scalar_select %p160, %s159, 8
          %s162 = smul.u32 16, %s161
          %s164 = ssub.s32 128, %s162
          %165 = vsyncadd %s151, %s164
          %p166 = scmp.ne.s32.totalorder 0, %s162
          %s167 = smul.addr %s158, 16
          %s168 = scalar_lea.hbm %s1, %s167
          %s169 = sshll.u32 %s161, 4
          %s170 = sshll.u32 %s154, 4
          %s171 = int_to_ptr.vmem [resolvable:$true] %s170
          %173 = dma.vmem_to_hbm [thread:$0]  (%p166), %s171, %s169, %s168, %s151
        $region32: #{tpu_custom_call.1} parent=23 // pred_fallthru
          _
      $region24: #{tpu_custom_call.1} parent=5 // pred_fallthru
        _
      %p174 = scmp.le.s32.totalorder 2, %s13
      // Predicated region
      $region33: #{tpu_custom_call.1} parent=5 // pred_check
        %p175 = pneg %p174
      $region34: #{tpu_custom_call.1} parent=5 // pred_check_branch
        %177 = sbr.rel (%p175) target = $region36
      $region35: #{tpu_custom_call.1} parent=5 // pred_region
        %s178 = ssub.s32 %s13, 2
        // Predicated region
        $region37: #{tpu_custom_call.1} parent=35 // pred_check
          %p179 = pneg %p68
        $region38: #{tpu_custom_call.1} parent=35 // pred_check_branch
          %181 = sbr.rel (%p179) target = $region40
        $region39: #{tpu_custom_call.1} parent=35 // pred_region
          %s182 = sand.u32 %s53, 1
          %s183 = scalar_lea.sflag [#allocation4], %s182
          %s184 = sand.u32 %s53, 1
          %s185 = smul.addr %s184, 8
          %s186 = scalar_lea.vmem [#allocation5], %s185
          %187 = dma.done %s183, 128
        $region40: #{tpu_custom_call.1} parent=35 // pred_fallthru
          _
      $region36: #{tpu_custom_call.1} parent=5 // pred_fallthru
        _
    $region6: #{tpu_custom_call.1} parent=1 // loop_footer
      %s17 = sadd.s32 1, %s13
    $region7: #{tpu_custom_call.1} parent=1 // loop_footer_branch
      %12 = sbr.rel target = $region3
    $region8: #{tpu_custom_call.1} parent=1 // loop_exit
      _
    %188 = vsyncpa [#allocation3], 1
    %s189 = scalar_lea.sflag [#allocation3], 1
    %190 = vsyncpa %s189, 1
    %191 = vsyncpa [#allocation4], 1
    %s192 = scalar_lea.sflag [#allocation4], 1
    %193 = vsyncpa %s192, 1

</llo_original>
